<compile_context>
chip_gen: v5e
topology: v5e:2x2
jax: 0.10.0
libtpu: 0.0.40
codegen_flags: <defaults>
</compile_context>

<pallas_src>
from functools import partial

import jax
import jax.numpy as jnp
from jax.experimental import pallas as pl
from jax.experimental.pallas import tpu as pltpu


def _boundary_kernel(x_ref, wq_ref, mask_ref, out_ref, *, att_scale):
    # x_ref:    [TM, H]  row tile of the flattened (B*S, H) activations
    # wq_ref:   [1, H]   folded query vector: wq = k_net_weight^T @ q
    # mask_ref: [1, TM]  float32, 1.0 == masked (att_mask[:, -1] flattened)
    # out_ref:  [1, TM]  sigmoid scores (lane-dense output)
    x = x_ref[...].astype(jnp.float32)                    # upcast if x is bf16
    wq = wq_ref[...]                                      # [1, H], broadcasts over rows
    score = jnp.sum(x * wq, axis=-1) * att_scale          # [TM]
    masked = mask_ref[0, :] > 0.5                         # [TM] bool
    # torch applies masked_fill twice with the same mask/value; it is
    # idempotent, so one application is exact.
    score = jnp.where(masked, jnp.float32(-60000.0), score)
    out_ref[0, :] = jax.nn.sigmoid(score)


def static_boundary_decision(x, mem, att_mask, params, *, row_tile=512):
    """JAX/Pallas equivalent of StaticBoundaryDecision.forward (eval mode)."""
    del mem  # `c = torch.cat([mem, x], 1)` is dead code in the reference forward.
    B, S, H = x.shape
    att_scale = 1.0 / (H ** 0.5)

    # Fold q into the weight:  (x @ W^T) . q  ==  x . (W^T q).
    wq = jnp.dot(params["k_net_weight"].T.astype(jnp.float32),
                 params["q"].astype(jnp.float32)).reshape(1, H)

    mask_last = att_mask[:, -1]                          # [B, S] bool, True == masked
    N = B * S
    x2 = x.reshape(N, H)
    mask_f = mask_last.astype(jnp.float32).reshape(1, N)

    # Row tiling: large lane-dense tiles; tiny inputs use one full block.
    if N >= row_tile:
        tm = row_tile
        n_pad = int(pl.cdiv(N, tm)) * tm
    else:
        tm = N
        n_pad = N
    if n_pad != N:
        x2 = jnp.pad(x2, ((0, n_pad - N), (0, 0)))
        mask_f = jnp.pad(mask_f, ((0, 0), (0, n_pad - N)))
    n_blocks = n_pad // tm

    # VMEM budget: double-buffered x tile dominates; generous headroom, capped
    # well under v7x's 64 MiB physical VMEM.
    itemsize = jnp.dtype(x2.dtype).itemsize
    vmem_limit = int(min(48 * 1024 * 1024,
                         max(4 * 1024 * 1024, 4 * tm * H * itemsize + (1 << 20))))

    out2 = pl.pallas_call(
        partial(_boundary_kernel, att_scale=att_scale),
        out_shape=jax.ShapeDtypeStruct((1, n_pad), jnp.float32),
        grid=(n_blocks,),
        in_specs=[
            # TODO(synk): sweep pipeline_mode=pl.Buffered(3) on this spec if the
            # x DMA is still exposed on v5e-class HBM with large tiles.
            pl.BlockSpec((tm, H), lambda i: (i, 0)),     # x rows
            pl.BlockSpec((1, H), lambda i: (0, 0)),      # folded query wq
            pl.BlockSpec((1, tm), lambda i: (0, i)),     # mask (lane-dense)
        ],
        out_specs=pl.BlockSpec((1, tm), lambda i: (0, i)),
        compiler_params=pltpu.CompilerParams(
            dimension_semantics=("parallel",),
            vmem_limit_bytes=vmem_limit,
        ),
    )(x2, wq, mask_f)

    out = out2[0, :N].reshape(B, S, 1)

    # TODO(synk): torch's `out.nonzero(as_tuple=True)` is dynamic-shaped; it is
    # computed here on the concrete kernel result (outside the kernel/jit).
    ind = jnp.nonzero(out)
    return ind, out


if __name__ == "__main__":
    B, S, H = 2, 8, 32

    key = jax.random.PRNGKey(0)
    k1, k2, k3, k4 = jax.random.split(key, 4)
    params = {
        "q": jax.random.normal(k1, (H,), jnp.float32) * 0.02,
        "k_net_weight": jax.random.normal(k2, (H, H), jnp.float32) * 0.02,
    }
    x = jax.random.normal(k3, (B, S, H), jnp.float32)
    att_mask = jax.random.bernoulli(k4, 0.3, (B, S, S))   # bool, True == masked

    ind, out = static_boundary_decision(x, None, att_mask, params)
    out = jax.block_until_ready(out)

    # Plain-JAX reference of the original two-step form (key = x @ W^T, dot q).
    mask_last = att_mask[:, -1]
    key_ref = jnp.einsum("bsd,kd->bsk", x, params["k_net_weight"])
    score_ref = jnp.einsum("bsk,k->bs", key_ref, params["q"])[..., None]
    score_ref = score_ref * (1.0 / H ** 0.5)
    score_ref = jnp.where(mask_last[..., None], -60000.0, score_ref)
    ref = jax.nn.sigmoid(score_ref)
    assert out.shape == (B, S, 1)
    assert jnp.allclose(out, ref, atol=1e-5), "kernel output mismatch vs reference"

    print("KERNEL_OK")
</pallas_src>

<mosaic_0001>
module attributes {stable_mosaic.version = 11 : i64} {
  func.func @_boundary_kernel(%arg0: i32, %arg1: memref<16x32xf32, #tpu.memory_space<vmem>>, %arg2: memref<1x32xf32, #tpu.memory_space<vmem>>, %arg3: memref<1x16xf32, #tpu.memory_space<vmem>>, %arg4: memref<1x16xf32, #tpu.memory_space<vmem>>) attributes {dimension_semantics = [#tpu.dimension_semantics<parallel>], iteration_bounds = array<i64: 1>, scalar_prefetch = 0 : i64, scratch_operands = 0 : i64, tpu.core_type = #tpu.core_type<tc>, window_params = [{transform_indices = @transform_0, window_bounds = array<i64: 16, 32>}, {pipeline_mode = #tpu.pipeline_mode<synchronous>, transform_indices = @transform_1, window_bounds = array<i64: 1, 32>}, {transform_indices = @transform_2, window_bounds = array<i64: 1, 16>}, {transform_indices = @transform_3, window_bounds = array<i64: 1, 16>}]} {
    %c0 = arith.constant 0 : index
    %c0_0 = arith.constant 0 : index
    %0 = vector.load %arg1[%c0, %c0_0] : memref<16x32xf32, #tpu.memory_space<vmem>>, vector<16x32xf32>
    %c0_1 = arith.constant 0 : index
    %c0_2 = arith.constant 0 : index
    %1 = vector.load %arg2[%c0_1, %c0_2] : memref<1x32xf32, #tpu.memory_space<vmem>>, vector<1x32xf32>
    %2 = vector.broadcast %1 : vector<1x32xf32> to vector<16x32xf32>
    %3 = arith.mulf %0, %2 : vector<16x32xf32>
    %cst = arith.constant dense<0.000000e+00> : vector<16xf32>
    %4 = vector.multi_reduction <add>, %3, %cst [1] : vector<16x32xf32> to vector<16xf32>
    %cst_3 = arith.constant 0.176776692 : f32
    %5 = vector.broadcast %cst_3 : f32 to vector<16xf32>
    %6 = arith.mulf %4, %5 : vector<16xf32>
    %c0_4 = arith.constant 0 : index
    %c0_5 = arith.constant 0 : index
    %7 = vector.load %arg3[%c0_4, %c0_5] : memref<1x16xf32, #tpu.memory_space<vmem>>, vector<1x16xf32>
    %8 = vector.shape_cast %7 : vector<1x16xf32> to vector<16xf32>
    %cst_6 = arith.constant 5.000000e-01 : f32
    %9 = vector.broadcast %cst_6 : f32 to vector<16xf32>
    %10 = arith.cmpf ogt, %8, %9 : vector<16xf32>
    %cst_7 = arith.constant -6.000000e+04 : f32
    %11 = vector.broadcast %cst_7 : f32 to vector<16xf32>
    %12 = arith.select %10, %11, %6 : vector<16xi1>, vector<16xf32>
    %13 = arith.negf %12 : vector<16xf32>
    %14 = math.exp %13 : vector<16xf32>
    %cst_8 = arith.constant 1.000000e+00 : f32
    %15 = vector.broadcast %cst_8 : f32 to vector<16xf32>
    %16 = arith.addf %15, %14 : vector<16xf32>
    %17 = arith.divf %15, %16 : vector<16xf32>
    %c0_9 = arith.constant 0 : index
    %c0_10 = arith.constant 0 : index
    %18 = vector.load %arg4[%c0_9, %c0_10] : memref<1x16xf32, #tpu.memory_space<vmem>>, vector<1x16xf32>
    %19 = vector.shape_cast %18 : vector<1x16xf32> to vector<16xf32>
    %20 = vector.shape_cast %17 : vector<16xf32> to vector<1x16xf32>
    tpu.vector_store %arg4[%c0_9, %c0_10], %20 {strides = array<i32>} : memref<1x16xf32, #tpu.memory_space<vmem>>, vector<1x16xf32>,
    return
  }
  func.func @transform_0(%arg0: i32) -> (i32, i32) {
    %c0_i32 = arith.constant 0 : i32
    %c0_i32_0 = arith.constant 0 : i32
    return %arg0, %c0_i32 : i32, i32
  }
  func.func @transform_1(%arg0: i32) -> (i32, i32) {
    %c0_i32 = arith.constant 0 : i32
    %c0_i32_0 = arith.constant 0 : i32
    %c0_i32_1 = arith.constant 0 : i32
    return %c0_i32, %c0_i32_0 : i32, i32
  }
  func.func @transform_2(%arg0: i32) -> (i32, i32) {
    %c0_i32 = arith.constant 0 : i32
    %c0_i32_0 = arith.constant 0 : i32
    return %c0_i32, %arg0 : i32, i32
  }
  func.func @transform_3(%arg0: i32) -> (i32, i32) {
    %c0_i32 = arith.constant 0 : i32
    %c0_i32_0 = arith.constant 0 : i32
    return %c0_i32, %arg0 : i32, i32
  }
}

</mosaic_0001>

<llo_original>
// kernel: tpu_custom_call.1
$region0: #{tpu_custom_call.1}
  #allocation0 [shape = 'u32[]', space=smem, size = 0x4, offset = 0x4, fixed_abs, tag = 'smem constant byte address 0x4 - core index']
  #allocation1 [shape = 'u32[72,128]{1,0:T(1,128)}', space=vmem, size = 0x9000, scoped, tag = 'internal scratch']
  %s0 = inlined_call_operand.hbm [shape: f32[16,32], index: 0, kind: input, shape index: {}]
  %s1 = inlined_call_operand.hbm [shape: f32[1,32], index: 1, kind: input, shape index: {}]
  %s2 = inlined_call_operand.vmem [shape: f32[1,16], index: 2, kind: input, shape index: {}]
  %s3 = inlined_call_operand.hbm [shape: f32[1,16], index: 3, kind: output, shape index: {}]
  %s4 = sld [smem:[#allocation0]]
  $region30: #{tpu_custom_call.1} parent=0
    _
  %s6 = ssub.s32 1, %s4
  %s7 = scalar_select 0, %s6, %s4
  $region1: #{tpu_custom_call.1} parent=0
    #allocation2 [shape = 'u8[8192]{0}', space=vmem, size = 0x2000, scoped, tag = 'input window, operand 0, single buffered']
    #allocation3 [shape = 's32[1]{0}', space=sflag, size = 0x4, scoped, tag = 'scoped memory for tpu_custom_call.1']
    #allocation4 [shape = 's32[1]{0}', space=sflag, size = 0x4, scoped, tag = 'scoped memory for tpu_custom_call.1']
    #allocation5 [shape = 'u8[512]{0}', space=vmem, size = 0x400, scoped, tag = 'input window, operand 1, single buffered']
    #allocation6 [shape = 's32[1]{0}', space=sflag, size = 0x4, scoped, tag = 'scoped memory for tpu_custom_call.1']
    #allocation7 [shape = 'u8[512]{0}', space=vmem, size = 0x400, scoped, tag = 'output window, operand 0, single buffered']
    %8 = vsyncpa [#allocation3], 0
    %9 = vsyncpa [#allocation6], 0
    %10 = vsyncpa [#allocation4], 0
    // Predicated region
    $region2: #{tpu_custom_call.1} parent=1 // pred_check
      _
    $region3: #{tpu_custom_call.1} parent=1 // pred_check_branch
      %12 = sbr.rel (0) target = $region5
    $region4: #{tpu_custom_call.1} parent=1 // pred_region
      %14 = vsyncadd [#allocation3], 0
      %s15 = sshll.u32 %s0, 4
      %s16 = int_to_ptr.hbm [resolvable:$true] %s15
      %s17 = sshll.u32 [#allocation2], 4
      %s18 = int_to_ptr.vmem [resolvable:$true] %s17
      %23 = dma.hbm_to_vmem [thread:$0]  %s16, 256, %s18, [#allocation3], 128, 128, 8
    $region5: #{tpu_custom_call.1} parent=1 // pred_fallthru
      _
    // Predicated region
    $region6: #{tpu_custom_call.1} parent=1 // pred_check
      _
    $region7: #{tpu_custom_call.1} parent=1 // pred_check_branch
      %25 = sbr.rel (0) target = $region9
    $region8: #{tpu_custom_call.1} parent=1 // pred_region
      %27 = vsyncadd [#allocation6], 0
      %s29 = sshll.u32 %s1, 4
      %s30 = int_to_ptr.hbm [resolvable:$true] %s29
      %s31 = sshll.u32 [#allocation5], 4
      %s32 = int_to_ptr.vmem [resolvable:$true] %s31
      %34 = dma.hbm_to_vmem [thread:$0]  %s30, 16, %s32, [#allocation6]
    $region9: #{tpu_custom_call.1} parent=1 // pred_fallthru
      _
    // Predicated region
    $region10: #{tpu_custom_call.1} parent=1 // pred_check
      _
    $region11: #{tpu_custom_call.1} parent=1 // pred_check_branch
      %36 = sbr.rel (0) target = $region13
    $region12: #{tpu_custom_call.1} parent=1 // pred_region
      _
    $region13: #{tpu_custom_call.1} parent=1 // pred_fallthru
      _
    // Predicated region
    $region14: #{tpu_custom_call.1} parent=1 // pred_check
      _
    $region15: #{tpu_custom_call.1} parent=1 // pred_check_branch
      %38 = sbr.rel (0) target = $region17
    $region16: #{tpu_custom_call.1} parent=1 // pred_region
      %40 = dma.done [#allocation3], 256
    $region17: #{tpu_custom_call.1} parent=1 // pred_fallthru
      _
    // Predicated region
    $region18: #{tpu_custom_call.1} parent=1 // pred_check
      _
    $region19: #{tpu_custom_call.1} parent=1 // pred_check_branch
      %42 = sbr.rel (0) target = $region21
    $region20: #{tpu_custom_call.1} parent=1 // pred_region
      %44 = dma.done [#allocation6], 16
    $region21: #{tpu_custom_call.1} parent=1 // pred_fallthru
      _
    %v45 = vld [vmem:[#allocation2] sm:$0xff]
    %v46 = vld [vmem:[#allocation2 + $0x8] sm:$0xff]
    %v47 = vld [vmem:[#allocation5] sm:$0x1]
    %v49 = vperm.slane %v47, 0
    %v51 = vmul.f32 %v45, %v49
    %v52 = vmul.f32 %v46, %v49
    %vm53 = vcmask 261120
    %v54 = vsel %vm53, %v51, 0.0
    %55 = vadd.xlane.f32.xlu0 %v54
    %v56 = vpop.xlane.xlu0 %55
    %v57 = vsel %vm53, %v52, 0.0
    %58 = vadd.xlane.f32.xlu0 %v57
    %v59 = vpop.xlane.xlu0 %58
    %v60 = vmul.f32 %v56, 0.17677669
    %v61 = vmul.f32 %v59, 0.17677669
    %v62 = vld [vmem:[%s2] sm:$0x1]
    %vm63 = vcmp.gt.f32.partialorder %v62, 0.5
    %v66 = vperm.slane %v60, 0
    %v67 = vperm.slane %v60, 1
    %v68 = vperm.slane %v60, 2
    %v69 = vperm.slane %v60, 3
    %v70 = vperm.slane %v60, 4
    %v71 = vperm.slane %v60, 5
    %v72 = vperm.slane %v60, 6
    %v73 = vperm.slane %v60, 7
    %v74 = vperm.slane %v61, 0
    %v75 = vperm.slane %v61, 1
    %v76 = vperm.slane %v61, 2
    %v77 = vperm.slane %v61, 3
    %v78 = vperm.slane %v61, 4
    %v79 = vperm.slane %v61, 5
    %v80 = vperm.slane %v61, 6
    %v81 = vperm.slane %v61, 7
    %82 = vst [vmem:[#allocation1] ss:$9 sm:$0xff] %v66
    %s83 = scalar_lea.vmem [#allocation1], 1
    %84 = vst [vmem:[%s83] ss:$9 sm:$0xff] %v67
    %s85 = scalar_lea.vmem [#allocation1], 2
    %86 = vst [vmem:[%s85] ss:$9 sm:$0xff] %v68
    %s87 = scalar_lea.vmem [#allocation1], 3
    %88 = vst [vmem:[%s87] ss:$9 sm:$0xff] %v69
    %s89 = scalar_lea.vmem [#allocation1], 4
    %90 = vst [vmem:[%s89] ss:$9 sm:$0xff] %v70
    %s91 = scalar_lea.vmem [#allocation1], 5
    %92 = vst [vmem:[%s91] ss:$9 sm:$0xff] %v71
    %s93 = scalar_lea.vmem [#allocation1], 6
    %94 = vst [vmem:[%s93] ss:$9 sm:$0xff] %v72
    %s95 = scalar_lea.vmem [#allocation1], 7
    %96 = vst [vmem:[%s95] ss:$9 sm:$0xff] %v73
    %v97 = vld [vmem:[#allocation1] sm:$0xff]
    %98 = vst [vmem:[#allocation1] ss:$9 sm:$0xff] %v74
    %99 = vst [vmem:[%s83] ss:$9 sm:$0xff] %v75
    %100 = vst [vmem:[%s85] ss:$9 sm:$0xff] %v76
    %101 = vst [vmem:[%s87] ss:$9 sm:$0xff] %v77
    %102 = vst [vmem:[%s89] ss:$9 sm:$0xff] %v78
    %103 = vst [vmem:[%s91] ss:$9 sm:$0xff] %v79
    %104 = vst [vmem:[%s93] ss:$9 sm:$0xff] %v80
    %105 = vst [vmem:[%s95] ss:$9 sm:$0xff] %v81
    %v106 = vld [vmem:[#allocation1] sm:$0xff]
    %107 = vset.pattern.permute.xlu0 0
    %108 = vperm.xlu0 %107, %v97
    %v109 = vpop.permute.xlu0 %108
    %110 = vset.pattern.permute.xlu0 0
    %111 = vperm.xlu0 %110, %v106
    %v112 = vpop.permute.xlu0 %111
    %v113 = vlaneseq
    %v114 = vand.u32 %v113, 127
    %v115 = vperm.slane %v109, %v114
    %v116 = vadd.s32 %v114, 4294967288
    %v117 = vperm.slane %v112, %v116
    %vm118 = vcmask 130112
    %v119 = vsel %vm118, %v117, %v115
    %v121 = vsel %vm63, -60000.0, %v119
    %v122 = vxor.u32 %v121, 2147483648
    %v123 = vmul.f32 %v122, 1.442695
    %v124 = vpow.pop %v123
    %v125 = vadd.f32 %v124, 1.0
    %v126 = vrcp.pop %v125
    %v127 = vmul.f32 %v125, %v126
    %v128 = vsub.f32 1.0, %v127
    %v129 = vmul.f32 %v126, %v128
    %v130 = vadd.f32 %v126, %v129
    %vm131 = vweird.f32 %v125
    %vm132 = vweird.f32 %v126
    %vm133 = vmor %vm131, %vm132
    %v134 = vsel %vm133, %v126, %v130
    %v135 = vand.u32 2147483647, %v125
    %vm136 = vcmp.eq.f32.partialorder %v135, 8.507059e+37
    %v137 = vand.u32 %v125, 2147483648
    %v138 = vor.u32 1.1754944e-38, %v137
    %v139 = vsel %vm136, %v138, %v134
    %v140 = vmul.f32 1.0, %v139
    %vm141 = vcmask 122880
    %142 = vst.msk [vmem:[#allocation7] sm:$0x1] %vm141, %v140
    // Predicated region
    $region22: #{tpu_custom_call.1} parent=1 // pred_check
      _
    $region23: #{tpu_custom_call.1} parent=1 // pred_check_branch
      %144 = sbr.rel (0) target = $region25
    $region24: #{tpu_custom_call.1} parent=1 // pred_region
      %146 = vsyncadd [#allocation4], 0
      %s148 = sshll.u32 [#allocation7], 4
      %s149 = int_to_ptr.vmem [resolvable:$true] %s148
      %s150 = sshll.u32 %s3, 4
      %s151 = int_to_ptr.hbm [resolvable:$true] %s150
      %153 = dma.vmem_to_hbm [thread:$0]  %s149, 16, %s151, [#allocation4]
    $region25: #{tpu_custom_call.1} parent=1 // pred_fallthru
      _
    // Predicated region
    $region26: #{tpu_custom_call.1} parent=1 // pred_check
      _
    $region27: #{tpu_custom_call.1} parent=1 // pred_check_branch
      %155 = sbr.rel (0) target = $region29
    $region28: #{tpu_custom_call.1} parent=1 // pred_region
      %157 = dma.done [#allocation4], 16
    $region29: #{tpu_custom_call.1} parent=1 // pred_fallthru
      _
    %158 = vsyncpa [#allocation3], 1
    %159 = vsyncpa [#allocation6], 1
    %160 = vsyncpa [#allocation4], 1

</llo_original>
